<compile_context>
chip_gen: v5e
topology: v5e:2x2
jax: 0.10.0
libtpu: 0.0.40
codegen_flags: <defaults>
</compile_context>

<pallas_src>
import numpy as np
import jax
import jax.numpy as jnp
from jax.experimental import pallas as pl
from jax.experimental.pallas import tpu as pltpu


# ----------------------------------------------------------------------------
# Lattice (pure glue, deterministic constants — mirrors MechanicalGrapheneLattice)
# ----------------------------------------------------------------------------
class MechanicalGrapheneLattice:
    def __init__(self, l: float, alpha: float) -> None:
        self.l = l
        self.alpha = alpha
        self.xw = np.pi / np.sqrt(3) * 2 / l
        self.yw = np.pi / 3 * 4 / l
        x = np.array([[1.0], [0.0]])
        y = np.array([[0.0], [1.0]])
        self.a1 = np.sqrt(3) * l * x                      # (2,1)
        self.a2 = (np.sqrt(3) * x + 3 * y) * l / 2.0      # (2,1)
        r1 = (self.a1 + self.a2) / 3.0
        r2 = (-2 * self.a1 + self.a2) / 3.0
        r3 = (self.a1 - 2 * self.a2) / 3.0
        r1h = r1 / np.linalg.norm(r1)
        r2h = r2 / np.linalg.norm(r2)
        r3h = r3 / np.linalg.norm(r3)
        # rih * rih.conj().T in torch is the outer product (values are real)
        self.r11 = r1h @ r1h.T
        self.r22 = r2h @ r2h.T
        self.r33 = r3h @ r3h.T
        z = np.array([[0.0, 1.0], [-1.0, 0.0]])
        r1_ = z @ r1h
        r2_ = z @ r2h
        r3_ = z @ r3h
        r11_ = r1_ @ r1_.T
        r22_ = r2_ @ r2_.T
        r33_ = r3_ @ r3_.T
        self.g1 = (1 - alpha) * r11_ + self.r11
        self.g2 = (1 - alpha) * r22_ + self.r22
        self.g3 = (1 - alpha) * r33_ + self.r33


# ----------------------------------------------------------------------------
# Pallas kernel: k-dependent top-right 2x2 block of the bulk Hamiltonian
#   B_tr(k) = -w0^2 (g1 + conj(K1) g2 + conj(K2) g3),   K_j = exp(i k.a_j)
# Output plane (8, N): rows 0..3 = Re(B_tr) (row-major 2x2), rows 4..7 = Im(B_tr).
# The diagonal 2x2 blocks are k-independent constants and the bottom-left
# block is conj(B_tr); both are assembled wrapper-side.
# ----------------------------------------------------------------------------
def bulk_btr_pallas(k2, cre0, cre1, cre2, cim1, cim2, a1v, a2v, tn_cap=16384):
    """k2: (N, 2) f32 k-points.  All coefficients are Python-float tuples of
    length 4 (row-major flattened 2x2 matrices), baked in as literals.
    Returns a (8, N) f32 plane with N on the lane axis."""
    N = k2.shape[0]

    # --- adaptive, lane-dense tiling -------------------------------------
    n128 = pl.cdiv(N, 128)                     # 128-lane chunks needed
    cap_chunks = max(1, tn_cap // 128)
    if n128 <= 1:
        tn_chunks = 1                          # can't split a single chunk
    else:
        # aim for >= 2 balanced tiles (v7x megacore), capped for VMEM / overhead
        tn_chunks = min(cap_chunks, (n128 + 1) // 2)
    TN = tn_chunks * 128
    n_tiles = pl.cdiv(n128, tn_chunks)
    N_pad = n_tiles * TN
    # Double-buffered VMEM per call: ~2*(2+8)*4*TN bytes <= ~2.6 MiB at the cap,
    # below the smallest default scoped-VMEM limit (16 MiB on v5e).

    # lane-dense (2, N_pad) input plane (kx row, ky row); pad tail with zeros.
    # Padded columns produce garbage H entries that are sliced off below.
    kT = jnp.pad(k2.astype(jnp.float32).T, ((0, 0), (0, N_pad - N)))

    a1x, a1y = a1v
    a2x, a2y = a2v

    def kernel(k_ref, o_ref):
        kx = k_ref[0:1, :]                     # (1, TN)
        ky = k_ref[1:2, :]                     # (1, TN)
        # theta_j = k . a_j  (VPU scalar-immediate FMAs; no MXU — a K=2
        # contraction would waste >98% of a systolic tile)
        th1 = a1x * kx + a1y * ky
        th2 = a2x * kx + a2y * ky
        c1 = jnp.cos(th1)                      # EUP
        c2 = jnp.cos(th2)
        s1 = jnp.sin(th1)
        s2 = jnp.sin(th2)
        # 8 output rows, coefficients baked as scalar literals
        for r in range(4):
            o_ref[r:r + 1, :] = cre0[r] + cre1[r] * c1 + cre2[r] * c2
            o_ref[4 + r:5 + r, :] = cim1[r] * s1 + cim2[r] * s2

    out = pl.pallas_call(
        kernel,
        out_shape=jax.ShapeDtypeStruct((8, N_pad), jnp.float32),
        grid=(n_tiles,),
        in_specs=[pl.BlockSpec((2, TN), lambda i: (0, i))],   # k tile
        out_specs=pl.BlockSpec((8, TN), lambda i: (0, i)),
        compiler_params=pltpu.CompilerParams(
            dimension_semantics=("parallel",)),               # megacore on v7x
        cost_estimate=pl.CostEstimate(
            flops=40 * N_pad,
            transcendentals=4 * N_pad,
            bytes_accessed=(2 + 8) * 4 * N_pad),
    )(kT)
    return out[:, :N]


# ----------------------------------------------------------------------------
# MechanicalGraphene (Bulk, GKM=True, perturbation=True path)
# ----------------------------------------------------------------------------
class MechanicalGraphene:
    def __init__(self, kappa, alpha, m, lattice, shape, Omega=0.0,
                 GKM=True, perturbation=True):
        assert perturbation and GKM, \
            "only the (perturbation, GKM) bulk path is implemented"
        self.kappa = kappa
        self.alpha = alpha
        self.m = m
        self.lattice = lattice
        self.Omega = Omega
        self.GKM = GKM
        self.perturbation = perturbation
        self.omega0 = np.sqrt(kappa / m)
        dim = 4
        self.evals = jnp.zeros((shape, dim), dtype=jnp.complex64)
        self.evecs = jnp.zeros((shape, dim, dim), dtype=jnp.complex64)

        w0sq = self.omega0 ** 2
        lat = lattice
        g1, g2, g3 = lat.g1, lat.g2, lat.g3

        # k-dependent top-right 2x2 block coefficients (Python-float literals)
        #   Re(B_tr) = -w0^2 (g1 + c1 g2 + c2 g3)
        #   Im(B_tr) = +w0^2 (s1 g2 + s2 g3)
        self.cre0 = tuple((-w0sq * g1).ravel().tolist())
        self.cre1 = tuple((-w0sq * g2).ravel().tolist())
        self.cre2 = tuple((-w0sq * g3).ravel().tolist())
        self.cim1 = tuple((+w0sq * g2).ravel().tolist())
        self.cim2 = tuple((+w0sq * g3).ravel().tolist())

        # constant diagonal 2x2 block:
        #   A = w0^2 (r11+r22+r33)(2-alpha) - 2*Omega*sigma_y
        A_re = w0sq * (lat.r11 + lat.r22 + lat.r33) * (2 - alpha)
        A_im = np.array([[0.0, 2 * Omega], [-2 * Omega, 0.0]])
        self.A_diag = jnp.asarray(A_re + 1j * A_im, jnp.complex64)  # (2, 2)

        self.a1v = (float(lat.a1[0, 0]), float(lat.a1[1, 0]))
        self.a2v = (float(lat.a2[0, 0]), float(lat.a2[1, 0]))
        self.last_H = None

    def forward(self, idcs, ks):
        # ks: (N, 2, 1) float32 (real k-vectors, matching the torch cdouble columns)
        k2 = ks[:, :, 0]
        N = k2.shape[0]
        planes = bulk_btr_pallas(k2, self.cre0, self.cre1, self.cre2,
                                 self.cim1, self.cim2, self.a1v, self.a2v)
        # Reassemble H wrapper-side (layout plumbing only): transpose in f32,
        # combine with lax.complex, broadcast the constant diagonal block, and
        # mirror the bottom-left block as conj(B_tr).
        bt = planes.T                                   # (N, 8) f32
        br = bt[:, 0:4].reshape(N, 2, 2)
        bi = bt[:, 4:8].reshape(N, 2, 2)
        B_tr = jax.lax.complex(br, bi)                  # (N, 2, 2) c64
        B_bl = jax.lax.complex(br, -bi)
        A_b = jnp.broadcast_to(self.A_diag, (N, 2, 2))
        H = jnp.concatenate(
            [jnp.concatenate([A_b, B_tr], axis=2),
             jnp.concatenate([B_bl, A_b], axis=2)], axis=1)   # (N, 4, 4) c64
        self.last_H = H

        # TODO(synk): torch.linalg.eig (general non-Hermitian eigendecomposition)
        # has no Pallas/TPU kernel; H is Hermitian in the perturbation path, so
        # jnp.linalg.eigh is used (identical eigenpairs, already real eigenvalues).
        w, v = jnp.linalg.eigh(H)
        evals = w.astype(jnp.complex64)
        # Mirror the original: sort by real part, and apply the same index to
        # evecs along axis 1 (the original indexes rows: evecs[i][ia]; this is
        # a no-op here since eigh already returns ascending eigenvalues).
        ia = jnp.argsort(evals.real, axis=-1)
        evals_sorted = jnp.take_along_axis(evals, ia, axis=-1)
        evecs_sorted = jnp.take_along_axis(v, ia[:, :, None], axis=1)
        if self.perturbation:
            # sqrt only the freshly written slice (avoids re-sqrt'ing entries
            # written by earlier forward() calls with different idcs)
            evals_sorted = jnp.sqrt(evals_sorted)
        self.evals = self.evals.at[idcs].set(evals_sorted)
        self.evecs = self.evecs.at[idcs].set(evecs_sorted)
        return None

    def dispersion(self):
        return np.asarray(self.evals.real), np.asarray(self.evecs)


# ----------------------------------------------------------------------------
# Reference (numpy) Hamiltonian for a sanity check of the Pallas output
# ----------------------------------------------------------------------------
def _ref_H(ks_np, lat, omega0, alpha, Omega):
    N = ks_np.shape[0]
    sy = np.array([[0, -1j], [1j, 0]])
    r_sum = lat.r11 + lat.r22 + lat.r33
    Hs = np.zeros((N, 4, 4), dtype=np.complex128)
    for i in range(N):
        k = ks_np[i, :, 0]
        K1 = np.exp(1j * (k @ lat.a1[:, 0]))
        K2 = np.exp(1j * (k @ lat.a2[:, 0]))
        A = r_sum * (2 - alpha) - 2 * Omega * sy / omega0 ** 2
        B_tr = -(lat.g1 + np.conj(K1) * lat.g2 + np.conj(K2) * lat.g3)
        B_bl = -(lat.g1 + K1 * lat.g2 + K2 * lat.g3)
        Hs[i] = omega0 ** 2 * np.block([[A, B_tr], [B_bl, A]])
    return Hs


if __name__ == "__main__":
    l = 1.0
    kappa = 1.0
    alpha = 0.3
    m = 1.0
    Omega = 0.5
    N = 300   # small, but exercises 2 grid tiles + padded tail

    lat = MechanicalGrapheneLattice(l, alpha)
    model = MechanicalGraphene(kappa, alpha, m, lat, shape=N, Omega=Omega,
                               GKM=True, perturbation=True)

    key = jax.random.PRNGKey(0)
    kx = jax.random.uniform(key, (N, 1, 1), minval=-lat.xw, maxval=lat.xw)
    ky = jax.random.uniform(jax.random.fold_in(key, 1), (N, 1, 1),
                            minval=-lat.yw, maxval=lat.yw)
    ks = jnp.concatenate([kx, ky], axis=1).astype(jnp.float32)   # (N, 2, 1)
    idcs = jnp.arange(N)

    model.forward(idcs, ks)
    jax.block_until_ready((model.evals, model.evecs))

    # sanity check: Pallas-built Hamiltonian vs numpy reference
    H_ref = _ref_H(np.asarray(ks, dtype=np.float64), lat, model.omega0, alpha, Omega)
    H_ker = np.asarray(model.last_H)
    assert np.allclose(H_ker, H_ref, atol=2e-4, rtol=2e-4), \
        f"max err {np.abs(H_ker - H_ref).max()}"

    print("KERNEL_OK")
</pallas_src>

<mosaic_0001>
module attributes {stable_mosaic.version = 11 : i64} {
  func.func @kernel(%arg0: i32, %arg1: memref<2x256xf32, #tpu.memory_space<vmem>>, %arg2: memref<8x256xf32, #tpu.memory_space<vmem>>) attributes {dimension_semantics = [#tpu.dimension_semantics<parallel>], iteration_bounds = array<i64: 2>, scalar_prefetch = 0 : i64, scratch_operands = 0 : i64, tpu.core_type = #tpu.core_type<tc>, window_params = [{transform_indices = @transform_0, window_bounds = array<i64: 2, 256>}, {transform_indices = @transform_1, window_bounds = array<i64: 8, 256>}]} {
    %c0 = arith.constant 0 : index
    %c0_0 = arith.constant 0 : index
    %0 = vector.load %arg1[%c0, %c0_0] : memref<2x256xf32, #tpu.memory_space<vmem>>, vector<1x256xf32>
    %c1 = arith.constant 1 : index
    %c0_1 = arith.constant 0 : index
    %1 = vector.load %arg1[%c1, %c0_1] : memref<2x256xf32, #tpu.memory_space<vmem>>, vector<1x256xf32>
    %cst = arith.constant 1.73205078 : f32
    %2 = vector.broadcast %cst : f32 to vector<1x256xf32>
    %3 = arith.mulf %2, %0 : vector<1x256xf32>
    %cst_2 = arith.constant 0.000000e+00 : f32
    %4 = vector.broadcast %cst_2 : f32 to vector<1x256xf32>
    %5 = arith.mulf %4, %1 : vector<1x256xf32>
    %6 = arith.addf %3, %5 : vector<1x256xf32>
    %cst_3 = arith.constant 0.866025388 : f32
    %7 = vector.broadcast %cst_3 : f32 to vector<1x256xf32>
    %8 = arith.mulf %7, %0 : vector<1x256xf32>
    %cst_4 = arith.constant 1.500000e+00 : f32
    %9 = vector.broadcast %cst_4 : f32 to vector<1x256xf32>
    %10 = arith.mulf %9, %1 : vector<1x256xf32>
    %11 = arith.addf %8, %10 : vector<1x256xf32>
    %12 = math.cos %6 : vector<1x256xf32>
    %13 = math.cos %11 : vector<1x256xf32>
    %14 = math.sin %6 : vector<1x256xf32>
    %15 = math.sin %11 : vector<1x256xf32>
    %cst_5 = arith.constant -9.250000e-01 : f32
    %16 = vector.broadcast %cst_5 : f32 to vector<1x256xf32>
    %17 = arith.mulf %16, %12 : vector<1x256xf32>
    %cst_6 = arith.constant -9.250000e-01 : f32
    %18 = vector.broadcast %cst_6 : f32 to vector<1x256xf32>
    %19 = arith.addf %18, %17 : vector<1x256xf32>
    %cst_7 = arith.constant -0.699999988 : f32
    %20 = vector.broadcast %cst_7 : f32 to vector<1x256xf32>
    %21 = arith.mulf %20, %13 : vector<1x256xf32>
    %22 = arith.addf %19, %21 : vector<1x256xf32>
    %c0_8 = arith.constant 0 : index
    %c0_9 = arith.constant 0 : index
    %23 = vector.load %arg2[%c0_8, %c0_9] : memref<8x256xf32, #tpu.memory_space<vmem>>, vector<1x256xf32>
    tpu.vector_store %arg2[%c0_8, %c0_9], %22 {strides = array<i32>} : memref<8x256xf32, #tpu.memory_space<vmem>>, vector<1x256xf32>,
    %cst_10 = arith.constant 9.250000e-01 : f32
    %24 = vector.broadcast %cst_10 : f32 to vector<1x256xf32>
    %25 = arith.mulf %24, %14 : vector<1x256xf32>
    %cst_11 = arith.constant 0.699999988 : f32
    %26 = vector.broadcast %cst_11 : f32 to vector<1x256xf32>
    %27 = arith.mulf %26, %15 : vector<1x256xf32>
    %28 = arith.addf %25, %27 : vector<1x256xf32>
    %c4 = arith.constant 4 : index
    %c0_12 = arith.constant 0 : index
    %29 = vector.load %arg2[%c4, %c0_12] : memref<8x256xf32, #tpu.memory_space<vmem>>, vector<1x256xf32>
    tpu.vector_store %arg2[%c4, %c0_12], %28 {strides = array<i32>} : memref<8x256xf32, #tpu.memory_space<vmem>>, vector<1x256xf32>,
    %cst_13 = arith.constant 0.129903808 : f32
    %30 = vector.broadcast %cst_13 : f32 to vector<1x256xf32>
    %31 = arith.mulf %30, %12 : vector<1x256xf32>
    %cst_14 = arith.constant -0.129903808 : f32
    %32 = vector.broadcast %cst_14 : f32 to vector<1x256xf32>
    %33 = arith.addf %32, %31 : vector<1x256xf32>
    %cst_15 = arith.constant -0.000000e+00 : f32
    %34 = vector.broadcast %cst_15 : f32 to vector<1x256xf32>
    %35 = arith.mulf %34, %13 : vector<1x256xf32>
    %36 = arith.addf %33, %35 : vector<1x256xf32>
    %c1_16 = arith.constant 1 : index
    %c0_17 = arith.constant 0 : index
    %37 = vector.load %arg2[%c1_16, %c0_17] : memref<8x256xf32, #tpu.memory_space<vmem>>, vector<1x256xf32>
    tpu.vector_store %arg2[%c1_16, %c0_17], %36 {strides = array<i32>} : memref<8x256xf32, #tpu.memory_space<vmem>>, vector<1x256xf32>,
    %cst_18 = arith.constant -0.129903808 : f32
    %38 = vector.broadcast %cst_18 : f32 to vector<1x256xf32>
    %39 = arith.mulf %38, %14 : vector<1x256xf32>
    %cst_19 = arith.constant 0.000000e+00 : f32
    %40 = vector.broadcast %cst_19 : f32 to vector<1x256xf32>
    %41 = arith.mulf %40, %15 : vector<1x256xf32>
    %42 = arith.addf %39, %41 : vector<1x256xf32>
    %c5 = arith.constant 5 : index
    %c0_20 = arith.constant 0 : index
    %43 = vector.load %arg2[%c5, %c0_20] : memref<8x256xf32, #tpu.memory_space<vmem>>, vector<1x256xf32>
    tpu.vector_store %arg2[%c5, %c0_20], %42 {strides = array<i32>} : memref<8x256xf32, #tpu.memory_space<vmem>>, vector<1x256xf32>,
    %cst_21 = arith.constant 0.129903808 : f32
    %44 = vector.broadcast %cst_21 : f32 to vector<1x256xf32>
    %45 = arith.mulf %44, %12 : vector<1x256xf32>
    %cst_22 = arith.constant -0.129903808 : f32
    %46 = vector.broadcast %cst_22 : f32 to vector<1x256xf32>
    %47 = arith.addf %46, %45 : vector<1x256xf32>
    %cst_23 = arith.constant -0.000000e+00 : f32
    %48 = vector.broadcast %cst_23 : f32 to vector<1x256xf32>
    %49 = arith.mulf %48, %13 : vector<1x256xf32>
    %50 = arith.addf %47, %49 : vector<1x256xf32>
    %c2 = arith.constant 2 : index
    %c0_24 = arith.constant 0 : index
    %51 = vector.load %arg2[%c2, %c0_24] : memref<8x256xf32, #tpu.memory_space<vmem>>, vector<1x256xf32>
    tpu.vector_store %arg2[%c2, %c0_24], %50 {strides = array<i32>} : memref<8x256xf32, #tpu.memory_space<vmem>>, vector<1x256xf32>,
    %cst_25 = arith.constant -0.129903808 : f32
    %52 = vector.broadcast %cst_25 : f32 to vector<1x256xf32>
    %53 = arith.mulf %52, %14 : vector<1x256xf32>
    %cst_26 = arith.constant 0.000000e+00 : f32
    %54 = vector.broadcast %cst_26 : f32 to vector<1x256xf32>
    %55 = arith.mulf %54, %15 : vector<1x256xf32>
    %56 = arith.addf %53, %55 : vector<1x256xf32>
    %c6 = arith.constant 6 : index
    %c0_27 = arith.constant 0 : index
    %57 = vector.load %arg2[%c6, %c0_27] : memref<8x256xf32, #tpu.memory_space<vmem>>, vector<1x256xf32>
    tpu.vector_store %arg2[%c6, %c0_27], %56 {strides = array<i32>} : memref<8x256xf32, #tpu.memory_space<vmem>>, vector<1x256xf32>,
    %cst_28 = arith.constant -0.774999976 : f32
    %58 = vector.broadcast %cst_28 : f32 to vector<1x256xf32>
    %59 = arith.mulf %58, %12 : vector<1x256xf32>
    %cst_29 = arith.constant -0.774999976 : f32
    %60 = vector.broadcast %cst_29 : f32 to vector<1x256xf32>
    %61 = arith.addf %60, %59 : vector<1x256xf32>
    %cst_30 = arith.constant -1.000000e+00 : f32
    %62 = vector.broadcast %cst_30 : f32 to vector<1x256xf32>
    %63 = arith.mulf %62, %13 : vector<1x256xf32>
    %64 = arith.addf %61, %63 : vector<1x256xf32>
    %c3 = arith.constant 3 : index
    %c0_31 = arith.constant 0 : index
    %65 = vector.load %arg2[%c3, %c0_31] : memref<8x256xf32, #tpu.memory_space<vmem>>, vector<1x256xf32>
    tpu.vector_store %arg2[%c3, %c0_31], %64 {strides = array<i32>} : memref<8x256xf32, #tpu.memory_space<vmem>>, vector<1x256xf32>,
    %cst_32 = arith.constant 0.774999976 : f32
    %66 = vector.broadcast %cst_32 : f32 to vector<1x256xf32>
    %67 = arith.mulf %66, %14 : vector<1x256xf32>
    %cst_33 = arith.constant 1.000000e+00 : f32
    %68 = vector.broadcast %cst_33 : f32 to vector<1x256xf32>
    %69 = arith.mulf %68, %15 : vector<1x256xf32>
    %70 = arith.addf %67, %69 : vector<1x256xf32>
    %c7 = arith.constant 7 : index
    %c0_34 = arith.constant 0 : index
    %71 = vector.load %arg2[%c7, %c0_34] : memref<8x256xf32, #tpu.memory_space<vmem>>, vector<1x256xf32>
    tpu.vector_store %arg2[%c7, %c0_34], %70 {strides = array<i32>} : memref<8x256xf32, #tpu.memory_space<vmem>>, vector<1x256xf32>,
    return
  }
  func.func @transform_0(%arg0: i32) -> (i32, i32) {
    %c0_i32 = arith.constant 0 : i32
    %c0_i32_0 = arith.constant 0 : i32
    return %c0_i32, %arg0 : i32, i32
  }
  func.func @transform_1(%arg0: i32) -> (i32, i32) {
    %c0_i32 = arith.constant 0 : i32
    %c0_i32_0 = arith.constant 0 : i32
    return %c0_i32, %arg0 : i32, i32
  }
}

</mosaic_0001>

<llo_original>
// kernel: tpu_custom_call.1
$region0: #{tpu_custom_call.1}
  #allocation0 [shape = 'u32[]', space=smem, size = 0x4, offset = 0x4, fixed_abs, tag = 'smem constant byte address 0x4 - core index']
  #allocation1 [shape = 'u32[72,128]{1,0:T(1,128)}', space=vmem, size = 0x9000, scoped, tag = 'internal scratch']
  %s0 = inlined_call_operand.hbm [shape: f32[2,512], index: 0, kind: input, shape index: {}]
  %s1 = inlined_call_operand.hbm [shape: f32[8,512], index: 1, kind: output, shape index: {}]
  %s2 = sld [smem:[#allocation0]]
  $region41: #{tpu_custom_call.1} parent=0
    _
  %s4 = ssub.s32 1, %s2
  %s5 = scalar_select 0, %s4, %s2
  $region1: #{tpu_custom_call.1} parent=0
    #allocation2 [shape = 'u8[4096]{0}', space=vmem, size = 0x1000, scoped, tag = 'input window, operand 0']
    #allocation3 [shape = 's32[2]{0}', space=sflag, size = 0x8, scoped, tag = 'scoped memory for tpu_custom_call.1']
    #allocation4 [shape = 's32[2]{0}', space=sflag, size = 0x8, scoped, tag = 'scoped memory for tpu_custom_call.1']
    #allocation5 [shape = 'u8[16384]{0}', space=vmem, size = 0x4000, scoped, tag = 'output window, operand 0']
    %6 = vsyncpa [#allocation3], 0
    %s7 = scalar_lea.sflag [#allocation3], 1
    %8 = vsyncpa %s7, 0
    %9 = vsyncpa [#allocation4], 0
    %s10 = scalar_lea.sflag [#allocation4], 1
    %11 = vsyncpa %s10, 0
    loop: start=0, step=1, limit=4
    $region2: #{tpu_custom_call.1} parent=1 // loop_pre_header
      _
    $region3: #{tpu_custom_call.1} parent=1 // loop_header
      %s13 = sphi 0, %s17
      %p14 = scmp.ge.s32.totalorder %s13, 4
      %s23 = sphi 0, %s25
      %s26 = sphi 0, %s23
      %s27 = sphi 0, %s26
      %s43 = sphi 0, %s27
      %s49 = sphi 0, %s51
      %s52 = sphi 0, %s49
      %s53 = sphi 0, %s52
      %s69 = sphi 0, %s53
    $region4: #{tpu_custom_call.1} parent=1 // loop_header_branch
      %16 = sbr.rel (%p14) target = $region8
    $region5: #{tpu_custom_call.1} parent=1 // loop_body
      %s18 = ssub.s32 %s13, 1
      %s19 = ssub.s32 %s13, 2
      %s20 = sadd.s32 %s13, 1
      %s21 = ssub.s32 %s13, %s20
      %p22 = scmp.eq.s32.totalorder %s21, 0
      %s24 = sadd.s32 %s23, 1
      %s25 = scalar_select %p22, %s23, %s24
      %p28 = pneg %p22
      %p29 = scmp.eq.s32.totalorder %s13, 1
      %p30 = por %p28, %p29
      %p31 = scmp.ne.s32.totalorder %s23, %s26
      %p32 = scmp.eq.s32.totalorder %s13, 0
      %p33 = por %p31, %p32
      %p34 = scmp.ne.s32.totalorder %s23, %s26
      %p35 = scmp.eq.s32.totalorder %s18, 1
      %p36 = por %p34, %p35
      %p37 = scmp.ne.s32.totalorder %s26, %s27
      %p38 = scmp.eq.s32.totalorder %s18, 0
      %p39 = por %p37, %p38
      %p40 = scmp.ne.s32.totalorder %s26, %s27
      %p41 = scmp.eq.s32.totalorder %s19, 1
      %p42 = por %p40, %p41
      %p44 = scmp.ne.s32.totalorder %s27, %s43
      %p45 = scmp.eq.s32.totalorder %s19, 0
      %p46 = por %p44, %p45
      %s47 = ssub.s32 %s13, %s20
      %p48 = scmp.eq.s32.totalorder %s47, 0
      %s50 = sadd.s32 %s49, 1
      %s51 = scalar_select %p48, %s49, %s50
      %p54 = pneg %p48
      %p55 = scmp.eq.s32.totalorder %s13, 1
      %p56 = por %p54, %p55
      %p57 = scmp.ne.s32.totalorder %s49, %s52
      %p58 = scmp.eq.s32.totalorder %s13, 0
      %p59 = por %p57, %p58
      %p60 = scmp.ne.s32.totalorder %s49, %s52
      %p61 = scmp.eq.s32.totalorder %s18, 1
      %p62 = por %p60, %p61
      %p63 = scmp.ne.s32.totalorder %s52, %s53
      %p64 = scmp.eq.s32.totalorder %s18, 0
      %p65 = por %p63, %p64
      %p66 = scmp.ne.s32.totalorder %s52, %s53
      %p67 = scmp.eq.s32.totalorder %s19, 1
      %p68 = por %p66, %p67
      %p70 = scmp.ne.s32.totalorder %s53, %s69
      %p71 = scmp.eq.s32.totalorder %s19, 0
      %p72 = por %p70, %p71
      %p73 = scmp.le.s32.totalorder 1, %s13
      %p74 = scmp.lt.s32.totalorder %s13, 3
      %p75 = pnand %p73, %p74
      %p76 = pneg %p75
      // Predicated region
      $region9: #{tpu_custom_call.1} parent=5 // pred_check
        _
      $region10: #{tpu_custom_call.1} parent=5 // pred_check_branch
        %78 = sbr.rel (%p75) target = $region12
      $region11: #{tpu_custom_call.1} parent=5 // pred_region
        %s79 = ssub.s32 %s13, 1
      $region12: #{tpu_custom_call.1} parent=5 // pred_fallthru
        _
      %p80 = scmp.lt.s32.totalorder %s13, 2
      // Predicated region
      $region13: #{tpu_custom_call.1} parent=5 // pred_check
        %p81 = pneg %p80
      $region14: #{tpu_custom_call.1} parent=5 // pred_check_branch
        %83 = sbr.rel (%p81) target = $region16
      $region15: #{tpu_custom_call.1} parent=5 // pred_region
        // Predicated region
        $region17: #{tpu_custom_call.1} parent=15 // pred_check
          %p84 = pneg %p33
        $region18: #{tpu_custom_call.1} parent=15 // pred_check_branch
          %86 = sbr.rel (%p84) target = $region20
        $region19: #{tpu_custom_call.1} parent=15 // pred_region
          %s87 = sand.u32 %s23, 1
          %s88 = scalar_lea.sflag [#allocation3], %s87
          %s89 = sand.u32 %s23, 1
          %s90 = smul.addr %s89, 4
          %s91 = scalar_lea.vmem [#allocation2], %s90
          %s92 = smul.u32 2, %s13
          %94 = vsyncadd %s88, 0
          %s95 = smul.addr %s92, 2
          %s96 = scalar_lea.hbm %s0, %s95
          %s98 = sshll.u32 %s96, 4
          %s99 = int_to_ptr.hbm [resolvable:$true] %s98
          %s100 = sshll.u32 %s91, 4
          %s101 = int_to_ptr.vmem [resolvable:$true] %s100
          %103 = dma.hbm_to_vmem [thread:$0]  %s99, 64, %s101, %s88
        $region20: #{tpu_custom_call.1} parent=15 // pred_fallthru
          _
      $region16: #{tpu_custom_call.1} parent=5 // pred_fallthru
        _
      %p104 = scmp.le.s32.totalorder 1, %s13
      %p105 = scmp.lt.s32.totalorder %s13, 3
      %p106 = pnand %p104, %p105
      %p107 = pneg %p106
      // Predicated region
      $region21: #{tpu_custom_call.1} parent=5 // pred_check
        _
      $region22: #{tpu_custom_call.1} parent=5 // pred_check_branch
        %109 = sbr.rel (%p106) target = $region24
      $region23: #{tpu_custom_call.1} parent=5 // pred_region
        %s110 = ssub.s32 %s13, 1
        %s111 = sand.u32 %s26, 1
        %s112 = scalar_lea.sflag [#allocation3], %s111
        %s113 = sand.u32 %s26, 1
        %s114 = smul.addr %s113, 4
        %s115 = scalar_lea.vmem [#allocation2], %s114
        // Predicated region
        $region25: #{tpu_custom_call.1} parent=23 // pred_check
          %p116 = pneg %p39
        $region26: #{tpu_custom_call.1} parent=23 // pred_check_branch
          %118 = sbr.rel (%p116) target = $region28
        $region27: #{tpu_custom_call.1} parent=23 // pred_region
          %120 = dma.done %s112, 64
        $region28: #{tpu_custom_call.1} parent=23 // pred_fallthru
          _
        %s121 = sand.u32 %s26, 1
        %s122 = scalar_lea.sflag [#allocation3], %s121
        %s123 = sand.u32 %s26, 1
        %s124 = smul.addr %s123, 4
        %s125 = scalar_lea.vmem [#allocation2], %s124
        %p126 = pneg %p39
        %p127 = pneg %p36
        %p128 = pneg %p65
        %p129 = pneg %p62
        %s130 = sand.u32 %s52, 1
        %s131 = scalar_lea.sflag [#allocation4], %s130
        %s132 = sand.u32 %s52, 1
        %s133 = smul.addr %s132, 16
        %s134 = scalar_lea.vmem [#allocation5], %s133
        %s135 = smul.u32 2, %s18
        %s136 = smul.u32 2, %s18
        %v137 = vld [vmem:[%s115] ss:$2 sm:$0x3]
        %s138 = scalar_lea.vmem %s115, 1 [#allocation2]
        %v139 = vld [vmem:[%s138] ss:$2 sm:$0x3]
        %v140 = vmul.f32 %v137, 1.7320508
        %v141 = vmul.f32 %v139, 0.0
        %v142 = vadd.f32 %v140, %v141
        %v143 = vmul.f32 %v137, 0.8660254
        %v144 = vmul.f32 %v139, 1.5
        %v145 = vadd.f32 %v143, %v144
        %v146 = vand.u32 2147483647, %v142
        %vm147 = vcmp.le.f32.partialorder %v146, 0.7853982
        %vm148 = vcmp.lt.s32.totalorder %v142, 0
        %v149 = vand.u32 %v142, 2139095040
        %v150 = vshrl.u32 %v149, 23
        %v151 = vsub.s32 %v150, 127
        %v152 = vand.u32 2147483647, %v142
        %v153 = vand.u32 %v152, 8388607
        %v154 = vor.u32 %v153, 8388608
        %v155 = vsub.s32 0, %v154
        %v156 = vadd.s32 %v151, 1
        %vm157 = vcmp.gt.s32.totalorder %v156, 0
        %v158 = vsel %vm157, %v156, 0
        %v159 = vshrl.u32 %v158, 5
        %v160 = vand.u32 %v158, 31
        %v161 = vsub.s32 32, %v160
        %v162 = vshrl.u32 683565275, %v161
        %v163 = vshll.u32 683565275, %v160
        %v164 = vshrl.u32 2475754826, %v161
        %v165 = vor.u32 %v163, %v164
        %v166 = vshll.u32 2475754826, %v160
        %v167 = vshrl.u32 2131351028, %v161
        %v168 = vor.u32 %v166, %v167
        %v169 = vshll.u32 2131351028, %v160
        %v170 = vshrl.u32 2102212464, %v161
        %v171 = vor.u32 %v169, %v170
        %v172 = vshll.u32 2102212464, %v160
        %v173 = vshrl.u32 920167782, %v161
        %v174 = vor.u32 %v172, %v173
        %v175 = vshll.u32 920167782, %v160
        %v176 = vshrl.u32 1326507024, %v161
        %v177 = vor.u32 %v175, %v176
        %vm178 = vcmp.lt.s32.totalorder %v159, 1
        %vm179 = vcmp.lt.s32.totalorder %v159, 2
        %vm180 = vcmp.lt.s32.totalorder %v159, 3
        %vm181 = vcmp.lt.s32.totalorder %v159, 4
        %v182 = vsel %vm178, %v162, %v165
        %v183 = vsel %vm181, %v171, 2102212464
        %v184 = vsel %vm180, %v168, %v183
        %v185 = vsel %vm179, %v182, %v184
        %v186 = vsel %vm178, %v165, %v168
        %v187 = vsel %vm181, %v174, 920167782
        %v188 = vsel %vm180, %v171, %v187
        %v189 = vsel %vm179, %v186, %v188
        %v190 = vsel %vm178, %v168, %v171
        %v191 = vsel %vm181, %v177, 1326507024
        %v192 = vsel %vm180, %v174, %v191
        %v193 = vsel %vm179, %v190, %v192
        %v194 = vshll.u32 %v154, 8
        %v195 = vand.u32 %v194, 65535
        %v196 = vshrl.u32 %v194, 16
        %v197 = vand.u32 %v193, 65535
        %v198 = vshrl.u32 %v193, 16
        %v199 = vmul.u32 %v195, %v197
        %v200 = vmul.u32 %v195, %v198
        %v201 = vmul.u32 %v196, %v197
        %v202 = vmul.u32 %v196, %v198
        %v203 = vshll.u32 %v200, 16
        %v204 = vshrl.u32 %v200, 16
        %v205 = vshll.u32 %v201, 16
        %v206 = vshrl.u32 %v201, 16
        %vm207 = vc.u32 %v199, %v203
        %v208 = vsel %vm207, 1, 0
        %v209 = vadd.s32 %v199, %v203
        %v210 = vadd.s32 %v202, %v208
        %vm211 = vc.u32 %v209, %v205
        %v212 = vsel %vm211, 1, 0
        %v213 = vadd.s32 %v209, %v205
        %v214 = vadd.s32 %v210, %v212
        %v215 = vadd.s32 %v214, %v204
        %v216 = vadd.s32 %v215, %v206
        %v217 = vand.u32 %v194, 65535
        %v218 = vshrl.u32 %v194, 16
        %v219 = vand.u32 %v189, 65535
        %v220 = vshrl.u32 %v189, 16
        %v221 = vmul.u32 %v217, %v219
        %v222 = vmul.u32 %v217, %v220
        %v223 = vmul.u32 %v218, %v219
        %v224 = vmul.u32 %v218, %v220
        %v225 = vshll.u32 %v222, 16
        %v226 = vshrl.u32 %v222, 16
        %v227 = vshll.u32 %v223, 16
        %v228 = vshrl.u32 %v223, 16
        %vm229 = vc.u32 %v221, %v225
        %v230 = vsel %vm229, 1, 0
        %v231 = vadd.s32 %v221, %v225
        %v232 = vadd.s32 %v224, %v230
        %vm233 = vc.u32 %v231, %v227
        %v234 = vsel %vm233, 1, 0
        %v235 = vadd.s32 %v231, %v227
        %v236 = vadd.s32 %v232, %v234
        %v237 = vadd.s32 %v236, %v226
        %v238 = vadd.s32 %v237, %v228
        %v239 = vmul.u32 %v194, %v185
        %v240 = vadd.s32 %v216, %v235
        %vm241 = vc.u32 %v216, %v235
        %v242 = vadd.s32 %v238, 1
        %v243 = vsel %vm241, %v242, %v238
        %v244 = vadd.s32 %v239, %v243
        %v245 = vadd.s32 %v244, 536870912
        %v246 = vshrl.u32 %v245, 30
        %v247 = vshll.u32 %v246, 30
        %v248 = vsub.s32 %v244, %v247
        %vm249 = vcmp.lt.s32.totalorder %v248, 0
        %v250 = vsub.s32 0, %v248
        %v251 = vsel %vm249, %v250, %v248
        %v252 = vclz %v251
        %v253 = vsub.s32 %v252, 2
        %vm254 = vcmp.gt.s32.totalorder 0, %v253
        %v255 = vsel %vm254, 0, %v253
        %v256 = vsub.s32 32, %v255
        %v257 = vshll.u32 %v248, %v255
        %v258 = vshrl.u32 %v240, %v256
        %v259 = vor.u32 %v257, %v258
        %v260 = vsub.s32 4294967266, %v255
        %v261 = vadd.s32 %v260, 127
        %v262 = vshll.u32 %v261, 23
        %v263 = vor.u32 4788187, %v262
        %v264 = vand.u32 2147483647, %v263
        %v266 = vcvt.s32.f32 %v259
        %v267 = vmul.f32 %v266, %v264
        %v268 = vxor.u32 %v267, 2147483648
        %v269 = vsel %vm148, %v268, %v267
        %v270 = vsub.s32 4, %v246
        %v271 = vsel %vm148, %v270, %v246
        %v272 = vsel %vm147, %v142, %v269
        %v273 = vsel %vm147, 0, %v271
        %v274 = vmul.f32 %v272, %v272
        %v275 = vmul.f32 %v274, -0.001358992
        %v276 = vadd.f32 %v275, 0.041655596
        %v277 = vmul.f32 %v274, %v276
        %v278 = vadd.f32 %v277, -0.4999988
        %v279 = vmul.f32 %v274, %v278
        %v280 = vadd.f32 1.0, %v279
        %v281 = vmul.f32 %v272, %v272
        %v282 = vmul.f32 %v281, -0.00019511016
        %v283 = vadd.f32 %v282, 0.008332121
        %v284 = vmul.f32 %v281, %v283
        %v285 = vadd.f32 %v284, -0.16666654
        %v286 = vmul.f32 %v281, %v285
        %v287 = vadd.f32 %v286, 1.0
        %v288 = vmul.f32 %v287, %v272
        %vm289 = vweird.f32 %v142
        %v290 = vand.u32 %v273, 3
        %vm291 = vcmp.lt.s32.totalorder %v290, 2
        %vm292 = vcmp.eq.s32.totalorder %v290, 0
        %v293 = vxor.u32 %v288, 2147483648
        %v294 = vsel %vm292, %v280, %v293
        %vm295 = vcmp.eq.s32.totalorder %v290, 2
        %v296 = vxor.u32 %v280, 2147483648
        %v297 = vsel %vm295, %v296, %v288
        %v298 = vsel %vm291, %v294, %v297
        %v299 = vsel %vm289, nan, %v298
        %v300 = vand.u32 2147483647, %v145
        %vm301 = vcmp.le.f32.partialorder %v300, 0.7853982
        %vm302 = vcmp.lt.s32.totalorder %v145, 0
        %v303 = vand.u32 %v145, 2139095040
        %v304 = vshrl.u32 %v303, 23
        %v305 = vsub.s32 %v304, 127
        %v306 = vand.u32 2147483647, %v145
        %v307 = vand.u32 %v306, 8388607
        %v308 = vor.u32 %v307, 8388608
        %v309 = vsub.s32 0, %v308
        %v310 = vadd.s32 %v305, 1
        %vm311 = vcmp.gt.s32.totalorder %v310, 0
        %v312 = vsel %vm311, %v310, 0
        %v313 = vshrl.u32 %v312, 5
        %v314 = vand.u32 %v312, 31
        %v315 = vsub.s32 32, %v314
        %v316 = vshrl.u32 683565275, %v315
        %v317 = vshll.u32 683565275, %v314
        %v318 = vshrl.u32 2475754826, %v315
        %v319 = vor.u32 %v317, %v318
        %v320 = vshll.u32 2475754826, %v314
        %v321 = vshrl.u32 2131351028, %v315
        %v322 = vor.u32 %v320, %v321
        %v323 = vshll.u32 2131351028, %v314
        %v324 = vshrl.u32 2102212464, %v315
        %v325 = vor.u32 %v323, %v324
        %v326 = vshll.u32 2102212464, %v314
        %v327 = vshrl.u32 920167782, %v315
        %v328 = vor.u32 %v326, %v327
        %v329 = vshll.u32 920167782, %v314
        %v330 = vshrl.u32 1326507024, %v315
        %v331 = vor.u32 %v329, %v330
        %vm332 = vcmp.lt.s32.totalorder %v313, 1
        %vm333 = vcmp.lt.s32.totalorder %v313, 2
        %vm334 = vcmp.lt.s32.totalorder %v313, 3
        %vm335 = vcmp.lt.s32.totalorder %v313, 4
        %v336 = vsel %vm332, %v316, %v319
        %v337 = vsel %vm335, %v325, 2102212464
        %v338 = vsel %vm334, %v322, %v337
        %v339 = vsel %vm333, %v336, %v338
        %v340 = vsel %vm332, %v319, %v322
        %v341 = vsel %vm335, %v328, 920167782
        %v342 = vsel %vm334, %v325, %v341
        %v343 = vsel %vm333, %v340, %v342
        %v344 = vsel %vm332, %v322, %v325
        %v345 = vsel %vm335, %v331, 1326507024
        %v346 = vsel %vm334, %v328, %v345
        %v347 = vsel %vm333, %v344, %v346
        %v348 = vshll.u32 %v308, 8
        %v349 = vand.u32 %v348, 65535
        %v350 = vshrl.u32 %v348, 16
        %v351 = vand.u32 %v347, 65535
        %v352 = vshrl.u32 %v347, 16
        %v353 = vmul.u32 %v349, %v351
        %v354 = vmul.u32 %v349, %v352
        %v355 = vmul.u32 %v350, %v351
        %v356 = vmul.u32 %v350, %v352
        %v357 = vshll.u32 %v354, 16
        %v358 = vshrl.u32 %v354, 16
        %v359 = vshll.u32 %v355, 16
        %v360 = vshrl.u32 %v355, 16
        %vm361 = vc.u32 %v353, %v357
        %v362 = vsel %vm361, 1, 0
        %v363 = vadd.s32 %v353, %v357
        %v364 = vadd.s32 %v356, %v362
        %vm365 = vc.u32 %v363, %v359
        %v366 = vsel %vm365, 1, 0
        %v367 = vadd.s32 %v363, %v359
        %v368 = vadd.s32 %v364, %v366
        %v369 = vadd.s32 %v368, %v358
        %v370 = vadd.s32 %v369, %v360
        %v371 = vand.u32 %v348, 65535
        %v372 = vshrl.u32 %v348, 16
        %v373 = vand.u32 %v343, 65535
        %v374 = vshrl.u32 %v343, 16
        %v375 = vmul.u32 %v371, %v373
        %v376 = vmul.u32 %v371, %v374
        %v377 = vmul.u32 %v372, %v373
        %v378 = vmul.u32 %v372, %v374
        %v379 = vshll.u32 %v376, 16
        %v380 = vshrl.u32 %v376, 16
        %v381 = vshll.u32 %v377, 16
        %v382 = vshrl.u32 %v377, 16
        %vm383 = vc.u32 %v375, %v379
        %v384 = vsel %vm383, 1, 0
        %v385 = vadd.s32 %v375, %v379
        %v386 = vadd.s32 %v378, %v384
        %vm387 = vc.u32 %v385, %v381
        %v388 = vsel %vm387, 1, 0
        %v389 = vadd.s32 %v385, %v381
        %v390 = vadd.s32 %v386, %v388
        %v391 = vadd.s32 %v390, %v380
        %v392 = vadd.s32 %v391, %v382
        %v393 = vmul.u32 %v348, %v339
        %v394 = vadd.s32 %v370, %v389
        %vm395 = vc.u32 %v370, %v389
        %v396 = vadd.s32 %v392, 1
        %v397 = vsel %vm395, %v396, %v392
        %v398 = vadd.s32 %v393, %v397
        %v399 = vadd.s32 %v398, 536870912
        %v400 = vshrl.u32 %v399, 30
        %v401 = vshll.u32 %v400, 30
        %v402 = vsub.s32 %v398, %v401
        %vm403 = vcmp.lt.s32.totalorder %v402, 0
        %v404 = vsub.s32 0, %v402
        %v405 = vsel %vm403, %v404, %v402
        %v406 = vclz %v405
        %v407 = vsub.s32 %v406, 2
        %vm408 = vcmp.gt.s32.totalorder 0, %v407
        %v409 = vsel %vm408, 0, %v407
        %v410 = vsub.s32 32, %v409
        %v411 = vshll.u32 %v402, %v409
        %v412 = vshrl.u32 %v394, %v410
        %v413 = vor.u32 %v411, %v412
        %v414 = vsub.s32 4294967266, %v409
        %v415 = vadd.s32 %v414, 127
        %v416 = vshll.u32 %v415, 23
        %v417 = vor.u32 4788187, %v416
        %v418 = vand.u32 2147483647, %v417
        %v420 = vcvt.s32.f32 %v413
        %v421 = vmul.f32 %v420, %v418
        %v422 = vxor.u32 %v421, 2147483648
        %v423 = vsel %vm302, %v422, %v421
        %v424 = vsub.s32 4, %v400
        %v425 = vsel %vm302, %v424, %v400
        %v426 = vsel %vm301, %v145, %v423
        %v427 = vsel %vm301, 0, %v425
        %v428 = vmul.f32 %v426, %v426
        %v429 = vmul.f32 %v428, -0.001358992
        %v430 = vadd.f32 %v429, 0.041655596
        %v431 = vmul.f32 %v428, %v430
        %v432 = vadd.f32 %v431, -0.4999988
        %v433 = vmul.f32 %v428, %v432
        %v434 = vadd.f32 1.0, %v433
        %v435 = vmul.f32 %v426, %v426
        %v436 = vmul.f32 %v435, -0.00019511016
        %v437 = vadd.f32 %v436, 0.008332121
        %v438 = vmul.f32 %v435, %v437
        %v439 = vadd.f32 %v438, -0.16666654
        %v440 = vmul.f32 %v435, %v439
        %v441 = vadd.f32 %v440, 1.0
        %v442 = vmul.f32 %v441, %v426
        %vm443 = vweird.f32 %v145
        %v444 = vand.u32 %v427, 3
        %vm445 = vcmp.lt.s32.totalorder %v444, 2
        %vm446 = vcmp.eq.s32.totalorder %v444, 0
        %v447 = vxor.u32 %v442, 2147483648
        %v448 = vsel %vm446, %v434, %v447
        %vm449 = vcmp.eq.s32.totalorder %v444, 2
        %v450 = vxor.u32 %v434, 2147483648
        %v451 = vsel %vm449, %v450, %v442
        %v452 = vsel %vm445, %v448, %v451
        %v453 = vsel %vm443, nan, %v452
        %v454 = vand.u32 2147483647, %v142
        %vm455 = vcmp.le.f32.partialorder %v454, 0.7853982
        %vm456 = vcmp.lt.s32.totalorder %v142, 0
        %v457 = vand.u32 %v142, 2139095040
        %v458 = vshrl.u32 %v457, 23
        %v459 = vsub.s32 %v458, 127
        %v460 = vand.u32 2147483647, %v142
        %v461 = vand.u32 %v460, 8388607
        %v462 = vor.u32 %v461, 8388608
        %v463 = vsub.s32 0, %v462
        %v464 = vadd.s32 %v459, 1
        %vm465 = vcmp.gt.s32.totalorder %v464, 0
        %v466 = vsel %vm465, %v464, 0
        %v467 = vshrl.u32 %v466, 5
        %v468 = vand.u32 %v466, 31
        %v469 = vsub.s32 32, %v468
        %v470 = vshrl.u32 683565275, %v469
        %v471 = vshll.u32 683565275, %v468
        %v472 = vshrl.u32 2475754826, %v469
        %v473 = vor.u32 %v471, %v472
        %v474 = vshll.u32 2475754826, %v468
        %v475 = vshrl.u32 2131351028, %v469
        %v476 = vor.u32 %v474, %v475
        %v477 = vshll.u32 2131351028, %v468
        %v478 = vshrl.u32 2102212464, %v469
        %v479 = vor.u32 %v477, %v478
        %v480 = vshll.u32 2102212464, %v468
        %v481 = vshrl.u32 920167782, %v469
        %v482 = vor.u32 %v480, %v481
        %v483 = vshll.u32 920167782, %v468
        %v484 = vshrl.u32 1326507024, %v469
        %v485 = vor.u32 %v483, %v484
        %vm486 = vcmp.lt.s32.totalorder %v467, 1
        %vm487 = vcmp.lt.s32.totalorder %v467, 2
        %vm488 = vcmp.lt.s32.totalorder %v467, 3
        %vm489 = vcmp.lt.s32.totalorder %v467, 4
        %v490 = vsel %vm486, %v470, %v473
        %v491 = vsel %vm489, %v479, 2102212464
        %v492 = vsel %vm488, %v476, %v491
        %v493 = vsel %vm487, %v490, %v492
        %v494 = vsel %vm486, %v473, %v476
        %v495 = vsel %vm489, %v482, 920167782
        %v496 = vsel %vm488, %v479, %v495
        %v497 = vsel %vm487, %v494, %v496
        %v498 = vsel %vm486, %v476, %v479
        %v499 = vsel %vm489, %v485, 1326507024
        %v500 = vsel %vm488, %v482, %v499
        %v501 = vsel %vm487, %v498, %v500
        %v502 = vshll.u32 %v462, 8
        %v503 = vand.u32 %v502, 65535
        %v504 = vshrl.u32 %v502, 16
        %v505 = vand.u32 %v501, 65535
        %v506 = vshrl.u32 %v501, 16
        %v507 = vmul.u32 %v503, %v505
        %v508 = vmul.u32 %v503, %v506
        %v509 = vmul.u32 %v504, %v505
        %v510 = vmul.u32 %v504, %v506
        %v511 = vshll.u32 %v508, 16
        %v512 = vshrl.u32 %v508, 16
        %v513 = vshll.u32 %v509, 16
        %v514 = vshrl.u32 %v509, 16
        %vm515 = vc.u32 %v507, %v511
        %v516 = vsel %vm515, 1, 0
        %v517 = vadd.s32 %v507, %v511
        %v518 = vadd.s32 %v510, %v516
        %vm519 = vc.u32 %v517, %v513
        %v520 = vsel %vm519, 1, 0
        %v521 = vadd.s32 %v517, %v513
        %v522 = vadd.s32 %v518, %v520
        %v523 = vadd.s32 %v522, %v512
        %v524 = vadd.s32 %v523, %v514
        %v525 = vand.u32 %v502, 65535
        %v526 = vshrl.u32 %v502, 16
        %v527 = vand.u32 %v497, 65535
        %v528 = vshrl.u32 %v497, 16
        %v529 = vmul.u32 %v525, %v527
        %v530 = vmul.u32 %v525, %v528
        %v531 = vmul.u32 %v526, %v527
        %v532 = vmul.u32 %v526, %v528
        %v533 = vshll.u32 %v530, 16
        %v534 = vshrl.u32 %v530, 16
        %v535 = vshll.u32 %v531, 16
        %v536 = vshrl.u32 %v531, 16
        %vm537 = vc.u32 %v529, %v533
        %v538 = vsel %vm537, 1, 0
        %v539 = vadd.s32 %v529, %v533
        %v540 = vadd.s32 %v532, %v538
        %vm541 = vc.u32 %v539, %v535
        %v542 = vsel %vm541, 1, 0
        %v543 = vadd.s32 %v539, %v535
        %v544 = vadd.s32 %v540, %v542
        %v545 = vadd.s32 %v544, %v534
        %v546 = vadd.s32 %v545, %v536
        %v547 = vmul.u32 %v502, %v493
        %v548 = vadd.s32 %v524, %v543
        %vm549 = vc.u32 %v524, %v543
        %v550 = vadd.s32 %v546, 1
        %v551 = vsel %vm549, %v550, %v546
        %v552 = vadd.s32 %v547, %v551
        %v553 = vadd.s32 %v552, 536870912
        %v554 = vshrl.u32 %v553, 30
        %v555 = vshll.u32 %v554, 30
        %v556 = vsub.s32 %v552, %v555
        %vm557 = vcmp.lt.s32.totalorder %v556, 0
        %v558 = vsub.s32 0, %v556
        %v559 = vsel %vm557, %v558, %v556
        %v560 = vclz %v559
        %v561 = vsub.s32 %v560, 2
        %vm562 = vcmp.gt.s32.totalorder 0, %v561
        %v563 = vsel %vm562, 0, %v561
        %v564 = vsub.s32 32, %v563
        %v565 = vshll.u32 %v556, %v563
        %v566 = vshrl.u32 %v548, %v564
        %v567 = vor.u32 %v565, %v566
        %v568 = vsub.s32 4294967266, %v563
        %v569 = vadd.s32 %v568, 127
        %v570 = vshll.u32 %v569, 23
        %v571 = vor.u32 4788187, %v570
        %v572 = vand.u32 2147483647, %v571
        %v574 = vcvt.s32.f32 %v567
        %v575 = vmul.f32 %v574, %v572
        %v576 = vxor.u32 %v575, 2147483648
        %v577 = vsel %vm456, %v576, %v575
        %v578 = vsub.s32 4, %v554
        %v579 = vsel %vm456, %v578, %v554
        %v580 = vsel %vm455, %v142, %v577
        %v581 = vsel %vm455, 0, %v579
        %v582 = vmul.f32 %v580, %v580
        %v583 = vmul.f32 %v582, -0.001358992
        %v584 = vadd.f32 %v583, 0.041655596
        %v585 = vmul.f32 %v582, %v584
        %v586 = vadd.f32 %v585, -0.4999988
        %v587 = vmul.f32 %v582, %v586
        %v588 = vadd.f32 1.0, %v587
        %v589 = vmul.f32 %v580, %v580
        %v590 = vmul.f32 %v589, -0.00019511016
        %v591 = vadd.f32 %v590, 0.008332121
        %v592 = vmul.f32 %v589, %v591
        %v593 = vadd.f32 %v592, -0.16666654
        %v594 = vmul.f32 %v589, %v593
        %v595 = vadd.f32 %v594, 1.0
        %v596 = vmul.f32 %v595, %v580
        %vm597 = vweird.f32 %v142
        %v598 = vadd.s32 %v581, 3
        %v599 = vand.u32 %v598, 3
        %vm600 = vcmp.lt.s32.totalorder %v599, 2
        %vm601 = vcmp.eq.s32.totalorder %v599, 0
        %v602 = vxor.u32 %v596, 2147483648
        %v603 = vsel %vm601, %v588, %v602
        %vm604 = vcmp.eq.s32.totalorder %v599, 2
        %v605 = vxor.u32 %v588, 2147483648
        %v606 = vsel %vm604, %v605, %v596
        %v607 = vsel %vm600, %v603, %v606
        %v608 = vsel %vm597, nan, %v607
        %v609 = vand.u32 2147483647, %v145
        %vm610 = vcmp.le.f32.partialorder %v609, 0.7853982
        %vm611 = vcmp.lt.s32.totalorder %v145, 0
        %v612 = vand.u32 %v145, 2139095040
        %v613 = vshrl.u32 %v612, 23
        %v614 = vsub.s32 %v613, 127
        %v615 = vand.u32 2147483647, %v145
        %v616 = vand.u32 %v615, 8388607
        %v617 = vor.u32 %v616, 8388608
        %v618 = vsub.s32 0, %v617
        %v619 = vadd.s32 %v614, 1
        %vm620 = vcmp.gt.s32.totalorder %v619, 0
        %v621 = vsel %vm620, %v619, 0
        %v622 = vshrl.u32 %v621, 5
        %v623 = vand.u32 %v621, 31
        %v624 = vsub.s32 32, %v623
        %v625 = vshrl.u32 683565275, %v624
        %v626 = vshll.u32 683565275, %v623
        %v627 = vshrl.u32 2475754826, %v624
        %v628 = vor.u32 %v626, %v627
        %v629 = vshll.u32 2475754826, %v623
        %v630 = vshrl.u32 2131351028, %v624
        %v631 = vor.u32 %v629, %v630
        %v632 = vshll.u32 2131351028, %v623
        %v633 = vshrl.u32 2102212464, %v624
        %v634 = vor.u32 %v632, %v633
        %v635 = vshll.u32 2102212464, %v623
        %v636 = vshrl.u32 920167782, %v624
        %v637 = vor.u32 %v635, %v636
        %v638 = vshll.u32 920167782, %v623
        %v639 = vshrl.u32 1326507024, %v624
        %v640 = vor.u32 %v638, %v639
        %vm641 = vcmp.lt.s32.totalorder %v622, 1
        %vm642 = vcmp.lt.s32.totalorder %v622, 2
        %vm643 = vcmp.lt.s32.totalorder %v622, 3
        %vm644 = vcmp.lt.s32.totalorder %v622, 4
        %v645 = vsel %vm641, %v625, %v628
        %v646 = vsel %vm644, %v634, 2102212464
        %v647 = vsel %vm643, %v631, %v646
        %v648 = vsel %vm642, %v645, %v647
        %v649 = vsel %vm641, %v628, %v631
        %v650 = vsel %vm644, %v637, 920167782
        %v651 = vsel %vm643, %v634, %v650
        %v652 = vsel %vm642, %v649, %v651
        %v653 = vsel %vm641, %v631, %v634
        %v654 = vsel %vm644, %v640, 1326507024
        %v655 = vsel %vm643, %v637, %v654
        %v656 = vsel %vm642, %v653, %v655
        %v657 = vshll.u32 %v617, 8
        %v658 = vand.u32 %v657, 65535
        %v659 = vshrl.u32 %v657, 16
        %v660 = vand.u32 %v656, 65535
        %v661 = vshrl.u32 %v656, 16
        %v662 = vmul.u32 %v658, %v660
        %v663 = vmul.u32 %v658, %v661
        %v664 = vmul.u32 %v659, %v660
        %v665 = vmul.u32 %v659, %v661
        %v666 = vshll.u32 %v663, 16
        %v667 = vshrl.u32 %v663, 16
        %v668 = vshll.u32 %v664, 16
        %v669 = vshrl.u32 %v664, 16
        %vm670 = vc.u32 %v662, %v666
        %v671 = vsel %vm670, 1, 0
        %v672 = vadd.s32 %v662, %v666
        %v673 = vadd.s32 %v665, %v671
        %vm674 = vc.u32 %v672, %v668
        %v675 = vsel %vm674, 1, 0
        %v676 = vadd.s32 %v672, %v668
        %v677 = vadd.s32 %v673, %v675
        %v678 = vadd.s32 %v677, %v667
        %v679 = vadd.s32 %v678, %v669
        %v680 = vand.u32 %v657, 65535
        %v681 = vshrl.u32 %v657, 16
        %v682 = vand.u32 %v652, 65535
        %v683 = vshrl.u32 %v652, 16
        %v684 = vmul.u32 %v680, %v682
        %v685 = vmul.u32 %v680, %v683
        %v686 = vmul.u32 %v681, %v682
        %v687 = vmul.u32 %v681, %v683
        %v688 = vshll.u32 %v685, 16
        %v689 = vshrl.u32 %v685, 16
        %v690 = vshll.u32 %v686, 16
        %v691 = vshrl.u32 %v686, 16
        %vm692 = vc.u32 %v684, %v688
        %v693 = vsel %vm692, 1, 0
        %v694 = vadd.s32 %v684, %v688
        %v695 = vadd.s32 %v687, %v693
        %vm696 = vc.u32 %v694, %v690
        %v697 = vsel %vm696, 1, 0
        %v698 = vadd.s32 %v694, %v690
        %v699 = vadd.s32 %v695, %v697
        %v700 = vadd.s32 %v699, %v689
        %v701 = vadd.s32 %v700, %v691
        %v702 = vmul.u32 %v657, %v648
        %v703 = vadd.s32 %v679, %v698
        %vm704 = vc.u32 %v679, %v698
        %v705 = vadd.s32 %v701, 1
        %v706 = vsel %vm704, %v705, %v701
        %v707 = vadd.s32 %v702, %v706
        %v708 = vadd.s32 %v707, 536870912
        %v709 = vshrl.u32 %v708, 30
        %v710 = vshll.u32 %v709, 30
        %v711 = vsub.s32 %v707, %v710
        %vm712 = vcmp.lt.s32.totalorder %v711, 0
        %v713 = vsub.s32 0, %v711
        %v714 = vsel %vm712, %v713, %v711
        %v715 = vclz %v714
        %v716 = vsub.s32 %v715, 2
        %vm717 = vcmp.gt.s32.totalorder 0, %v716
        %v718 = vsel %vm717, 0, %v716
        %v719 = vsub.s32 32, %v718
        %v720 = vshll.u32 %v711, %v718
        %v721 = vshrl.u32 %v703, %v719
        %v722 = vor.u32 %v720, %v721
        %v723 = vsub.s32 4294967266, %v718
        %v724 = vadd.s32 %v723, 127
        %v725 = vshll.u32 %v724, 23
        %v726 = vor.u32 4788187, %v725
        %v727 = vand.u32 2147483647, %v726
        %v729 = vcvt.s32.f32 %v722
        %v730 = vmul.f32 %v729, %v727
        %v731 = vxor.u32 %v730, 2147483648
        %v732 = vsel %vm611, %v731, %v730
        %v733 = vsub.s32 4, %v709
        %v734 = vsel %vm611, %v733, %v709
        %v735 = vsel %vm610, %v145, %v732
        %v736 = vsel %vm610, 0, %v734
        %v737 = vmul.f32 %v735, %v735
        %v738 = vmul.f32 %v737, -0.001358992
        %v739 = vadd.f32 %v738, 0.041655596
        %v740 = vmul.f32 %v737, %v739
        %v741 = vadd.f32 %v740, -0.4999988
        %v742 = vmul.f32 %v737, %v741
        %v743 = vadd.f32 1.0, %v742
        %v744 = vmul.f32 %v735, %v735
        %v745 = vmul.f32 %v744, -0.00019511016
        %v746 = vadd.f32 %v745, 0.008332121
        %v747 = vmul.f32 %v744, %v746
        %v748 = vadd.f32 %v747, -0.16666654
        %v749 = vmul.f32 %v744, %v748
        %v750 = vadd.f32 %v749, 1.0
        %v751 = vmul.f32 %v750, %v735
        %vm752 = vweird.f32 %v145
        %v753 = vadd.s32 %v736, 3
        %v754 = vand.u32 %v753, 3
        %vm755 = vcmp.lt.s32.totalorder %v754, 2
        %vm756 = vcmp.eq.s32.totalorder %v754, 0
        %v757 = vxor.u32 %v751, 2147483648
        %v758 = vsel %vm756, %v743, %v757
        %vm759 = vcmp.eq.s32.totalorder %v754, 2
        %v760 = vxor.u32 %v743, 2147483648
        %v761 = vsel %vm759, %v760, %v751
        %v762 = vsel %vm755, %v758, %v761
        %v763 = vsel %vm752, nan, %v762
        %v764 = vmul.f32 %v299, -0.925
        %v765 = vadd.f32 %v764, -0.925
        %v766 = vmul.f32 %v453, -0.7
        %v767 = vadd.f32 %v765, %v766
        %v768 = vlaneseq
        %vm769 = vcmp.ge.s32.totalorder %v768, 0
        %vm770 = vcmp.lt.s32.totalorder %v768, 256
        %vm771 = vmand %vm769, %vm770
        %772 = vst.msk [vmem:[%s134] ss:$8 sm:$0x3] %vm771, %v767
        %773 = vst.msk [vmem:[%s134] ss:$8 sm:$0x0] %vm771, %v767
        %v774 = vmul.f32 %v608, 0.925
        %v775 = vmul.f32 %v763, 0.7
        %v776 = vadd.f32 %v774, %v775
        %s777 = scalar_lea.vmem %s134, 4 [#allocation5]
        %778 = vst.msk [vmem:[%s777] ss:$8 sm:$0x3] %vm771, %v776
        %779 = vst.msk [vmem:[%s777] ss:$8 sm:$0x0] %vm771, %v776
        %v780 = vmul.f32 %v299, 0.12990381
        %v781 = vadd.f32 %v780, -0.12990381
        %v782 = vmul.f32 %v453, -0.0
        %v783 = vadd.f32 %v781, %v782
        %s784 = scalar_lea.vmem %s134, 1 [#allocation5]
        %785 = vst.msk [vmem:[%s784] ss:$8 sm:$0x3] %vm771, %v783
        %786 = vst.msk [vmem:[%s784] ss:$8 sm:$0x0] %vm771, %v783
        %v787 = vmul.f32 %v608, -0.12990381
        %v788 = vmul.f32 %v763, 0.0
        %v789 = vadd.f32 %v787, %v788
        %s790 = scalar_lea.vmem %s134, 5 [#allocation5]
        %791 = vst.msk [vmem:[%s790] ss:$8 sm:$0x3] %vm771, %v789
        %792 = vst.msk [vmem:[%s790] ss:$8 sm:$0x0] %vm771, %v789
        %s793 = scalar_lea.vmem %s134, 2 [#allocation5]
        %794 = vst.msk [vmem:[%s793] ss:$8 sm:$0x3] %vm771, %v783
        %795 = vst.msk [vmem:[%s793] ss:$8 sm:$0x0] %vm771, %v783
        %s796 = scalar_lea.vmem %s134, 6 [#allocation5]
        %797 = vst.msk [vmem:[%s796] ss:$8 sm:$0x3] %vm771, %v789
        %798 = vst.msk [vmem:[%s796] ss:$8 sm:$0x0] %vm771, %v789
        %v799 = vmul.f32 %v299, -0.775
        %v800 = vadd.f32 %v799, -0.775
        %v801 = vmul.f32 %v453, -1.0
        %v802 = vadd.f32 %v800, %v801
        %s803 = scalar_lea.vmem %s134, 3 [#allocation5]
        %804 = vst.msk [vmem:[%s803] ss:$8 sm:$0x3] %vm771, %v802
        %805 = vst.msk [vmem:[%s803] ss:$8 sm:$0x0] %vm771, %v802
        %v806 = vmul.f32 %v608, 0.775
        %v807 = vadd.f32 %v806, %v763
        %s808 = scalar_lea.vmem %s134, 7 [#allocation5]
        %809 = vst.msk [vmem:[%s808] ss:$8 sm:$0x3] %vm771, %v807
        %810 = vst.msk [vmem:[%s808] ss:$8 sm:$0x0] %vm771, %v807
        %s811 = sand.u32 %s52, 1
        %s812 = scalar_lea.sflag [#allocation4], %s811
        %s813 = sand.u32 %s52, 1
        %s814 = smul.addr %s813, 16
        %s815 = scalar_lea.vmem [#allocation5], %s814
        // Predicated region
        $region29: #{tpu_custom_call.1} parent=23 // pred_check
          %p816 = pneg %p62
        $region30: #{tpu_custom_call.1} parent=23 // pred_check_branch
          %818 = sbr.rel (%p816) target = $region32
        $region31: #{tpu_custom_call.1} parent=23 // pred_region
          %s819 = smul.u32 2, %s18
          %821 = vsyncadd %s812, 0
          %s822 = smul.addr %s819, 8
          %s823 = scalar_lea.hbm %s1, %s822
          %s825 = sshll.u32 %s815, 4
          %s826 = int_to_ptr.vmem [resolvable:$true] %s825
          %s827 = sshll.u32 %s823, 4
          %s828 = int_to_ptr.hbm [resolvable:$true] %s827
          %830 = dma.vmem_to_hbm [thread:$0]  %s826, 256, %s828, %s812
        $region32: #{tpu_custom_call.1} parent=23 // pred_fallthru
          _
      $region24: #{tpu_custom_call.1} parent=5 // pred_fallthru
        _
      %p831 = scmp.le.s32.totalorder 2, %s13
      // Predicated region
      $region33: #{tpu_custom_call.1} parent=5 // pred_check
        %p832 = pneg %p831
      $region34: #{tpu_custom_call.1} parent=5 // pred_check_branch
        %834 = sbr.rel (%p832) target = $region36
      $region35: #{tpu_custom_call.1} parent=5 // pred_region
        %s835 = ssub.s32 %s13, 2
        // Predicated region
        $region37: #{tpu_custom_call.1} parent=35 // pred_check
          %p836 = pneg %p68
        $region38: #{tpu_custom_call.1} parent=35 // pred_check_branch
          %838 = sbr.rel (%p836) target = $region40
        $region39: #{tpu_custom_call.1} parent=35 // pred_region
          %s839 = sand.u32 %s53, 1
          %s840 = scalar_lea.sflag [#allocation4], %s839
          %s841 = sand.u32 %s53, 1
          %s842 = smul.addr %s841, 16
          %s843 = scalar_lea.vmem [#allocation5], %s842
          %845 = dma.done %s840, 256
        $region40: #{tpu_custom_call.1} parent=35 // pred_fallthru
          _
      $region36: #{tpu_custom_call.1} parent=5 // pred_fallthru
        _
    $region6: #{tpu_custom_call.1} parent=1 // loop_footer
      %s17 = sadd.s32 1, %s13
    $region7: #{tpu_custom_call.1} parent=1 // loop_footer_branch
      %12 = sbr.rel target = $region3
    $region8: #{tpu_custom_call.1} parent=1 // loop_exit
      _
    %846 = vsyncpa [#allocation3], 1
    %s847 = scalar_lea.sflag [#allocation3], 1
    %848 = vsyncpa %s847, 1
    %849 = vsyncpa [#allocation4], 1
    %s850 = scalar_lea.sflag [#allocation4], 1
    %851 = vsyncpa %s850, 1

</llo_original>
